<compile_context>
chip_gen: v5e
topology: v5e:2x2
jax: 0.10.0
libtpu: 0.0.40
codegen_flags: <defaults>
</compile_context>

<pallas_src>
import jax
import jax.numpy as jnp
from jax.experimental import pallas as pl
from jax.experimental.pallas import tpu as pltpu


def _round_up(x, m):
    return ((x + m - 1) // m) * m


def _embed_kernel(labels_ref, table_ref, out_ref, acc_ref):
    # labels_ref : (tb, 1)  int32   batch tile of class ids
    # table_ref  : (tkv, Hp)        vocab-chunk of the padded table
    # out_ref    : (tb, Hp)         output tile (resident across the k axis)
    # acc_ref    : (tb, Hp) f32     accumulator scratch
    k = pl.program_id(1)

    @pl.when(k == 0)
    def _():
        acc_ref[...] = jnp.zeros_like(acc_ref)

    labels = labels_ref[...]                                   # (tb, 1)
    tb = labels.shape[0]
    tkv = table_ref.shape[0]
    col = jax.lax.broadcasted_iota(jnp.int32, (tb, tkv), 1) + k * tkv
    onehot = (labels == col).astype(table_ref.dtype)           # (tb, tkv)
    acc_ref[...] += jnp.dot(
        onehot,
        table_ref[...],
        preferred_element_type=jnp.float32,
        precision=jax.lax.Precision.HIGHEST,   # exact row gather on all gens
    )

    @pl.when(k == pl.num_programs(1) - 1)
    def _():
        out_ref[...] = acc_ref[...].astype(out_ref.dtype)


def _vmem_capacity_bytes():
    try:
        return int(pltpu.get_tpu_info().vmem_capacity_bytes)
    except Exception:
        return 64 * 1024 * 1024  # conservative: v7x per-TensorCore VMEM


def _vmem_footprint(tb, tkv, Hp, itemsize):
    return (
        2 * tkv * Hp * itemsize       # double-buffered table tile
        + 2 * tb * 128 * 4            # labels tile (lane-padded to 128), 2 bufs
        + 2 * tb * Hp * itemsize      # double-buffered output tile
        + tb * Hp * 4                 # f32 accumulator scratch
        + 2 * tb * tkv * 4            # iota + one-hot intermediates
        + (2 << 20)                   # slack
    )


def _choose_tiles(tb, Vp, Hp, itemsize):
    budget = int(_vmem_capacity_bytes() * 0.85)
    tkv = Vp
    # Prefer shrinking the batch tile (cheap) before K-tiling the table.
    while _vmem_footprint(tb, tkv, Hp, itemsize) > budget and tb > 256:
        tb = _round_up(max(8, tb // 2), 8)
    while _vmem_footprint(tb, tkv, Hp, itemsize) > budget and tkv > 512:
        tkv = _round_up(max(128, tkv // 2), 128)
    while _vmem_footprint(tb, tkv, Hp, itemsize) > budget and tb > 8:
        tb = _round_up(max(8, tb // 2), 8)
    return tb, tkv


def embed_lookup(labels, table, *, hidden_size=None, tb=None):
    """Pallas embedding lookup: returns table[labels][:, :hidden_size].

    `table` may already be padded to multiples of 128 (preferred: pad once at
    module init -> no per-call padding op); `hidden_size` is the logical
    embedding width to return.
    """
    B = labels.shape[0]
    V, H = table.shape
    dtype = table.dtype
    if hidden_size is None:
        hidden_size = H
    itemsize = jnp.dtype(dtype).itemsize

    Hp = _round_up(H, 128)
    Vp = _round_up(V, 128)

    if tb is None:
        tb = min(1024, _round_up(B, 8))
    elif tb % 8 != 0:
        raise ValueError(f"tb must be a multiple of 8, got {tb}")
    tb = min(tb, _round_up(B, 8))

    tb, tkv = _choose_tiles(tb, Vp, Hp, itemsize)
    Vp = _round_up(Vp, tkv)          # whole number of vocab chunks
    Bp = _round_up(B, tb)

    # No-op on the fast path (caller pre-padded the table at init).  Only the
    # huge-vocab K-tiled fallback can still require extra padding here.
    table_p = table
    if (Vp, Hp) != (V, H):
        table_p = jnp.zeros((Vp, Hp), dtype).at[:V, :H].set(table)

    # Padded labels map to row 0; the padded output rows are sliced off below.
    labels_p = jnp.zeros((Bp,), jnp.int32).at[:B].set(labels.astype(jnp.int32))
    labels2d = labels_p.reshape(Bp, 1)

    vmem_limit = min(
        max(_vmem_footprint(tb, tkv, Hp, itemsize), 32 * 1024 * 1024),
        _vmem_capacity_bytes(),
    )

    out = pl.pallas_call(
        _embed_kernel,
        out_shape=jax.ShapeDtypeStruct((Bp, Hp), dtype),
        grid_spec=pltpu.PrefetchScalarGridSpec(
            num_scalar_prefetch=0,
            grid=(Bp // tb, Vp // tkv),
            in_specs=[
                pl.BlockSpec((tb, 1), lambda i, k: (i, 0)),    # labels tile
                pl.BlockSpec((tkv, Hp), lambda i, k: (k, 0)),  # table chunk
            ],
            out_specs=pl.BlockSpec((tb, Hp), lambda i, k: (i, 0)),
            scratch_shapes=[pltpu.VMEM((tb, Hp), jnp.float32)],
        ),
        compiler_params=pltpu.CompilerParams(
            dimension_semantics=("parallel", "arbitrary"),
            vmem_limit_bytes=int(vmem_limit),
        ),
    )(labels2d, table_p)

    return out[:B, :hidden_size]


class LabelEmbedder:
    """JAX/Pallas port of the DiT LabelEmbedder forward pass."""

    def __init__(self, num_classes, hidden_size, dropout_prob, *, key,
                 dtype=jnp.float32):
        use_cfg_embedding = int(dropout_prob > 0)
        V = num_classes + use_cfg_embedding
        # nn.Embedding default init: N(0, 1)
        self.embedding_table = jax.random.normal(
            key, (V, hidden_size), dtype=jnp.float32).astype(dtype)
        self.num_classes = num_classes
        self.hidden_size = hidden_size
        self.dropout_prob = dropout_prob
        # Pad the table to lane-dense (multiple-of-128) shape ONCE at init so
        # the per-call wrapper does no extra HBM round-trip padding op.
        Vp = _round_up(V, 128)
        Hp = _round_up(hidden_size, 128)
        if (Vp, Hp) == (V, hidden_size):
            self._table_padded = self.embedding_table
        else:
            self._table_padded = (
                jnp.zeros((Vp, Hp), dtype)
                .at[:V, :hidden_size].set(self.embedding_table)
            )
        self._table_padded = jax.block_until_ready(self._table_padded)

    def token_drop(self, labels, key, force_drop_ids=None):
        if force_drop_ids is None:
            if key is None:
                raise ValueError(
                    "token_drop with dropout_prob > 0 requires a PRNG key")
            drop_ids = (
                jax.random.uniform(key, (labels.shape[0],)) < self.dropout_prob
            )
        else:
            drop_ids = jnp.asarray(force_drop_ids, dtype=bool)
        return jnp.where(drop_ids, self.num_classes, labels)

    def __call__(self, labels, train, *, key=None, force_drop_ids=None):
        use_dropout = self.dropout_prob > 0
        if (train and use_dropout) or (force_drop_ids is not None):
            labels = self.token_drop(labels, key, force_drop_ids)
        return embed_lookup(labels, self._table_padded,
                            hidden_size=self.hidden_size)


if __name__ == "__main__":
    num_classes = 10
    hidden_size = 32
    dropout_prob = 0.1
    B = 8

    root = jax.random.PRNGKey(0)
    k_table, k_labels, k_drop = jax.random.split(root, 3)

    embedder = LabelEmbedder(num_classes, hidden_size, dropout_prob, key=k_table)
    labels = jax.random.randint(k_labels, (B,), 0, num_classes, dtype=jnp.int32)

    # eval path (no dropout)
    out_eval = embedder(labels, train=False)
    out_eval = jax.block_until_ready(out_eval)
    ref_eval = jnp.take(embedder.embedding_table, labels, axis=0)
    assert out_eval.shape == (B, hidden_size)
    assert jnp.allclose(out_eval, ref_eval)

    # train path (classifier-free dropout of labels -> CFG row num_classes)
    out_train = embedder(labels, train=True, key=k_drop)
    out_train = jax.block_until_ready(out_train)
    drop_ids = jax.random.uniform(k_drop, (B,)) < dropout_prob
    dropped_labels = jnp.where(drop_ids, num_classes, labels)
    ref_train = jnp.take(embedder.embedding_table, dropped_labels, axis=0)
    assert jnp.allclose(out_train, ref_train)

    print("KERNEL_OK")
</pallas_src>

<mosaic_0001>
module attributes {stable_mosaic.version = 11 : i64} {
  func.func @_embed_kernel(%arg0: i32, %arg1: i32, %arg2: memref<8x1xi32, #tpu.memory_space<vmem>>, %arg3: memref<128x128xf32, #tpu.memory_space<vmem>>, %arg4: memref<8x128xf32, #tpu.memory_space<vmem>>, %arg5: memref<8x128xf32, #tpu.memory_space<vmem>>) attributes {dimension_semantics = [#tpu.dimension_semantics<parallel>, #tpu.dimension_semantics<arbitrary>], iteration_bounds = array<i64: 1, 1>, scalar_prefetch = 0 : i64, scratch_operands = 1 : i64, tpu.core_type = #tpu.core_type<tc>, window_params = [{transform_indices = @transform_0, window_bounds = array<i64: 8, 1>}, {transform_indices = @transform_1, window_bounds = array<i64: 128, 128>}, {transform_indices = @transform_2, window_bounds = array<i64: 8, 128>}]} {
    %c0_i32 = arith.constant 0 : i32
    %0 = arith.cmpi eq, %arg1, %c0_i32 : i32
    %1 = arith.extui %0 : i1 to i32
    %c0_i32_0 = arith.constant 0 : i32
    %2 = arith.cmpi ne, %1, %c0_i32_0 : i32
    scf.if %2 {
      %cst_10 = arith.constant 0.000000e+00 : f32
      %20 = vector.broadcast %cst_10 : f32 to vector<8x128xf32>
      %c0_11 = arith.constant 0 : index
      %c0_12 = arith.constant 0 : index
      %21 = vector.load %arg5[%c0_11, %c0_12] : memref<8x128xf32, #tpu.memory_space<vmem>>, vector<8x128xf32>
      tpu.vector_store %arg5[%c0_11, %c0_12], %20 {strides = array<i32>} : memref<8x128xf32, #tpu.memory_space<vmem>>, vector<8x128xf32>,
    } else {
    }
    %c0 = arith.constant 0 : index
    %c0_1 = arith.constant 0 : index
    %3 = vector.load %arg2[%c0, %c0_1] : memref<8x1xi32, #tpu.memory_space<vmem>>, vector<8x1xi32>
    %4 = tpu.iota {dimensions = array<i32: 1>} : vector<8x128xi32>
    %c128_i32 = arith.constant 128 : i32
    %5 = arith.muli %arg1, %c128_i32 : i32
    %6 = vector.broadcast %5 : i32 to vector<8x128xi32>
    %7 = arith.addi %4, %6 : vector<8x128xi32>
    %8 = vector.broadcast %3 : vector<8x1xi32> to vector<8x128xi32>
    %9 = arith.cmpi eq, %8, %7 : vector<8x128xi32>
    %10 = arith.extui %9 : vector<8x128xi1> to vector<8x128xi32>
    %11 = arith.sitofp %10 : vector<8x128xi32> to vector<8x128xf32>
    %c0_2 = arith.constant 0 : index
    %c0_3 = arith.constant 0 : index
    %12 = vector.load %arg5[%c0_2, %c0_3] : memref<8x128xf32, #tpu.memory_space<vmem>>, vector<8x128xf32>
    %c0_4 = arith.constant 0 : index
    %c0_5 = arith.constant 0 : index
    %13 = vector.load %arg3[%c0_4, %c0_5] : memref<128x128xf32, #tpu.memory_space<vmem>>, vector<128x128xf32>
    %cst = arith.constant dense<0.000000e+00> : vector<8x128xf32>
    %14 = tpu.matmul %11, %13, %cst {dimension_numbers = #tpu.dot_dimension_numbers<[1], [0], [0], [1], [0, 0, 1, 1], [], []>, precision = #tpu.contract_precision<fp32>} : vector<8x128xf32>, vector<128x128xf32>, vector<8x128xf32> -> vector<8x128xf32>
    %15 = arith.addf %12, %14 : vector<8x128xf32>
    %c0_6 = arith.constant 0 : index
    %c0_7 = arith.constant 0 : index
    %16 = vector.load %arg5[%c0_6, %c0_7] : memref<8x128xf32, #tpu.memory_space<vmem>>, vector<8x128xf32>
    tpu.vector_store %arg5[%c0_6, %c0_7], %15 {strides = array<i32>} : memref<8x128xf32, #tpu.memory_space<vmem>>, vector<8x128xf32>,
    %c0_i32_8 = arith.constant 0 : i32
    %17 = arith.cmpi eq, %arg1, %c0_i32_8 : i32
    %18 = arith.extui %17 : i1 to i32
    %c0_i32_9 = arith.constant 0 : i32
    %19 = arith.cmpi ne, %18, %c0_i32_9 : i32
    scf.if %19 {
      %c0_10 = arith.constant 0 : index
      %c0_11 = arith.constant 0 : index
      %20 = vector.load %arg5[%c0_10, %c0_11] : memref<8x128xf32, #tpu.memory_space<vmem>>, vector<8x128xf32>
      %c0_12 = arith.constant 0 : index
      %c0_13 = arith.constant 0 : index
      %21 = vector.load %arg4[%c0_12, %c0_13] : memref<8x128xf32, #tpu.memory_space<vmem>>, vector<8x128xf32>
      tpu.vector_store %arg4[%c0_12, %c0_13], %20 {strides = array<i32>} : memref<8x128xf32, #tpu.memory_space<vmem>>, vector<8x128xf32>,
    } else {
    }
    return
  }
  func.func @transform_0(%arg0: i32, %arg1: i32) -> (i32, i32) {
    %c0_i32 = arith.constant 0 : i32
    %c0_i32_0 = arith.constant 0 : i32
    return %arg0, %c0_i32 : i32, i32
  }
  func.func @transform_1(%arg0: i32, %arg1: i32) -> (i32, i32) {
    %c0_i32 = arith.constant 0 : i32
    %c0_i32_0 = arith.constant 0 : i32
    return %arg1, %c0_i32 : i32, i32
  }
  func.func @transform_2(%arg0: i32, %arg1: i32) -> (i32, i32) {
    %c0_i32 = arith.constant 0 : i32
    %c0_i32_0 = arith.constant 0 : i32
    return %arg0, %c0_i32 : i32, i32
  }
}

</mosaic_0001>

<llo_original>
// kernel: tpu_custom_call.1
$region0: #{tpu_custom_call.1}
  #allocation0 [shape = 'u32[]', space=smem, size = 0x4, offset = 0x4, fixed_abs, tag = 'smem constant byte address 0x4 - core index']
  #allocation1 [shape = 'u32[72,128]{1,0:T(1,128)}', space=vmem, size = 0x9000, scoped, tag = 'internal scratch']
  #allocation2 [shape = 'f32[8,128]{1,0:T(8,128)}', space=vmem, size = 0x1000, scoped, tag = 'scratch operand']
  %s0 = inlined_call_operand.vmem [shape: s32[8,1], index: 0, kind: input, shape index: {}]
  %s1 = inlined_call_operand.hbm [shape: f32[128,128], index: 1, kind: input, shape index: {}]
  %s2 = inlined_call_operand.hbm [shape: f32[8,128], index: 2, kind: output, shape index: {}]
  %s3 = sld [smem:[#allocation0]]
  $region30: #{tpu_custom_call.1} parent=0
    _
  %s5 = ssub.s32 1, %s3
  %s6 = scalar_select 0, %s5, %s3
  $region1: #{tpu_custom_call.1} parent=0
    #allocation3 [shape = 'u8[65536]{0}', space=vmem, size = 0x10000, scoped, tag = 'input window, operand 1, single buffered']
    #allocation4 [shape = 's32[1]{0}', space=sflag, size = 0x4, scoped, tag = 'scoped memory for tpu_custom_call.1']
    #allocation5 [shape = 's32[1]{0}', space=sflag, size = 0x4, scoped, tag = 'scoped memory for tpu_custom_call.1']
    #allocation6 [shape = 'u8[4096]{0}', space=vmem, size = 0x1000, scoped, tag = 'output window, operand 0, single buffered']
    %7 = vsyncpa [#allocation4], 0
    %8 = vsyncpa [#allocation5], 0
    // Predicated region
    $region2: #{tpu_custom_call.1} parent=1 // pred_check
      _
    $region3: #{tpu_custom_call.1} parent=1 // pred_check_branch
      %10 = sbr.rel (0) target = $region5
    $region4: #{tpu_custom_call.1} parent=1 // pred_region
      _
    $region5: #{tpu_custom_call.1} parent=1 // pred_fallthru
      _
    // Predicated region
    $region6: #{tpu_custom_call.1} parent=1 // pred_check
      _
    $region7: #{tpu_custom_call.1} parent=1 // pred_check_branch
      %12 = sbr.rel (0) target = $region9
    $region8: #{tpu_custom_call.1} parent=1 // pred_region
      %14 = vsyncadd [#allocation4], 0
      %s15 = sshll.u32 %s1, 4
      %s16 = int_to_ptr.hbm [resolvable:$true] %s15
      %s17 = sshll.u32 [#allocation3], 4
      %s18 = int_to_ptr.vmem [resolvable:$true] %s17
      %23 = dma.hbm_to_vmem [thread:$0]  %s16, 2048, %s18, [#allocation4], 128, 128, 8
    $region9: #{tpu_custom_call.1} parent=1 // pred_fallthru
      _
    // Predicated region
    $region10: #{tpu_custom_call.1} parent=1 // pred_check
      _
    $region11: #{tpu_custom_call.1} parent=1 // pred_check_branch
      %25 = sbr.rel (0) target = $region13
    $region12: #{tpu_custom_call.1} parent=1 // pred_region
      %27 = dma.done [#allocation4], 2048
    $region13: #{tpu_custom_call.1} parent=1 // pred_fallthru
      _
    %p28 = scmp.eq.s32.totalorder 0, 0
    // Predicated region
    $region14: #{tpu_custom_call.1} parent=1 // pred_check
      %p29 = pneg %p28
    $region15: #{tpu_custom_call.1} parent=1 // pred_check_branch
      %31 = sbr.rel (%p29) target = $region17
    $region16: #{tpu_custom_call.1} parent=1 // pred_region
      %32 = vst [vmem:[#allocation2] sm:$0xff] 0.0
    $region17: #{tpu_custom_call.1} parent=1 // pred_fallthru
      _
    %v33 = vld [vmem:[%s0] sm:$0xff]
    %v34 = vlaneseq
    %v35 = vand.u32 %v34, 127
    %s36 = smul.u32 0, 128
    %v37 = vstv %s36
    %v38 = vadd.s32 %v35, %v37
    %39 = vset.pattern.permute.xlu0 0
    %40 = vperm.xlu0 %39, %v33
    %v41 = vpop.permute.xlu0 %40
    %vm42 = vcmp.eq.s32.totalorder %v41, %v38
    %v43 = vsel %vm42, 1, 0
    %v44 = vcvt.s32.f32 %v43
    %v45 = vld [vmem:[#allocation2] sm:$0xff]
    %v46 = vld [vmem:[#allocation3] sm:$0xff]
    %v47 = vld [vmem:[#allocation3 + $0x8] sm:$0xff]
    %v48 = vld [vmem:[#allocation3 + $0x10] sm:$0xff]
    %v49 = vld [vmem:[#allocation3 + $0x18] sm:$0xff]
    %v50 = vld [vmem:[#allocation3 + $0x20] sm:$0xff]
    %v51 = vld [vmem:[#allocation3 + $0x28] sm:$0xff]
    %v52 = vld [vmem:[#allocation3 + $0x30] sm:$0xff]
    %v53 = vld [vmem:[#allocation3 + $0x38] sm:$0xff]
    %v54 = vld [vmem:[#allocation3 + $0x40] sm:$0xff]
    %v55 = vld [vmem:[#allocation3 + $0x48] sm:$0xff]
    %v56 = vld [vmem:[#allocation3 + $0x50] sm:$0xff]
    %v57 = vld [vmem:[#allocation3 + $0x58] sm:$0xff]
    %v58 = vld [vmem:[#allocation3 + $0x60] sm:$0xff]
    %v59 = vld [vmem:[#allocation3 + $0x68] sm:$0xff]
    %v60 = vld [vmem:[#allocation3 + $0x70] sm:$0xff]
    %v61 = vld [vmem:[#allocation3 + $0x78] sm:$0xff]
    %v62 = vand.u32 %v61, 4294901760
    %63 = vmatpush.msra.mxu0 %v62
    %v64 = vand.u32 %v60, 4294901760
    %65 = vmatpush.msra.mxu0 %v64
    %v66 = vand.u32 %v59, 4294901760
    %67 = vmatpush.msra.mxu0 %v66
    %v68 = vand.u32 %v58, 4294901760
    %69 = vmatpush.msra.mxu0 %v68
    %v70 = vand.u32 %v57, 4294901760
    %71 = vmatpush.msra.mxu0 %v70
    %v72 = vand.u32 %v56, 4294901760
    %73 = vmatpush.msra.mxu0 %v72
    %v74 = vand.u32 %v55, 4294901760
    %75 = vmatpush.msra.mxu0 %v74
    %v76 = vand.u32 %v54, 4294901760
    %77 = vmatpush.msra.mxu0 %v76
    %v78 = vand.u32 %v53, 4294901760
    %79 = vmatpush.msra.mxu0 %v78
    %v80 = vand.u32 %v52, 4294901760
    %81 = vmatpush.msra.mxu0 %v80
    %v82 = vand.u32 %v51, 4294901760
    %83 = vmatpush.msra.mxu0 %v82
    %v84 = vand.u32 %v50, 4294901760
    %85 = vmatpush.msra.mxu0 %v84
    %v86 = vand.u32 %v49, 4294901760
    %87 = vmatpush.msra.mxu0 %v86
    %v88 = vand.u32 %v48, 4294901760
    %89 = vmatpush.msra.mxu0 %v88
    %v90 = vand.u32 %v47, 4294901760
    %91 = vmatpush.msra.mxu0 %v90
    %v92 = vand.u32 %v46, 4294901760
    %93 = vmatpush.msra.mxu0 %v92
    %v94 = vand.u32 %v44, 4294901760
    %v95 = vsub.f32 %v44, %v94
    %v96 = vand.u32 %v95, 4294901760
    %v97 = vsub.f32 %v95, %v96
    %v98 = vand.u32 %v97, 4294901760
    %99 = vmatmul.f32.gmra.mxu0 %v98
    %v100 = vpop.f32.mrf.mxu0
    %v101 = vadd.f32 0.0, %v100
    %102 = vdwg.mxu0
    %v103 = vand.u32 %v61, 4294901760
    %v104 = vsub.f32 %v61, %v103
    %v105 = vand.u32 %v104, 4294901760
    %v106 = vsub.f32 %v104, %v105
    %v107 = vand.u32 %v106, 4294901760
    %108 = vmatpush.msra.mxu0 %v107
    %v109 = vand.u32 %v60, 4294901760
    %v110 = vsub.f32 %v60, %v109
    %v111 = vand.u32 %v110, 4294901760
    %v112 = vsub.f32 %v110, %v111
    %v113 = vand.u32 %v112, 4294901760
    %114 = vmatpush.msra.mxu0 %v113
    %v115 = vand.u32 %v59, 4294901760
    %v116 = vsub.f32 %v59, %v115
    %v117 = vand.u32 %v116, 4294901760
    %v118 = vsub.f32 %v116, %v117
    %v119 = vand.u32 %v118, 4294901760
    %120 = vmatpush.msra.mxu0 %v119
    %v121 = vand.u32 %v58, 4294901760
    %v122 = vsub.f32 %v58, %v121
    %v123 = vand.u32 %v122, 4294901760
    %v124 = vsub.f32 %v122, %v123
    %v125 = vand.u32 %v124, 4294901760
    %126 = vmatpush.msra.mxu0 %v125
    %v127 = vand.u32 %v57, 4294901760
    %v128 = vsub.f32 %v57, %v127
    %v129 = vand.u32 %v128, 4294901760
    %v130 = vsub.f32 %v128, %v129
    %v131 = vand.u32 %v130, 4294901760
    %132 = vmatpush.msra.mxu0 %v131
    %v133 = vand.u32 %v56, 4294901760
    %v134 = vsub.f32 %v56, %v133
    %v135 = vand.u32 %v134, 4294901760
    %v136 = vsub.f32 %v134, %v135
    %v137 = vand.u32 %v136, 4294901760
    %138 = vmatpush.msra.mxu0 %v137
    %v139 = vand.u32 %v55, 4294901760
    %v140 = vsub.f32 %v55, %v139
    %v141 = vand.u32 %v140, 4294901760
    %v142 = vsub.f32 %v140, %v141
    %v143 = vand.u32 %v142, 4294901760
    %144 = vmatpush.msra.mxu0 %v143
    %v145 = vand.u32 %v54, 4294901760
    %v146 = vsub.f32 %v54, %v145
    %v147 = vand.u32 %v146, 4294901760
    %v148 = vsub.f32 %v146, %v147
    %v149 = vand.u32 %v148, 4294901760
    %150 = vmatpush.msra.mxu0 %v149
    %v151 = vand.u32 %v53, 4294901760
    %v152 = vsub.f32 %v53, %v151
    %v153 = vand.u32 %v152, 4294901760
    %v154 = vsub.f32 %v152, %v153
    %v155 = vand.u32 %v154, 4294901760
    %156 = vmatpush.msra.mxu0 %v155
    %v157 = vand.u32 %v52, 4294901760
    %v158 = vsub.f32 %v52, %v157
    %v159 = vand.u32 %v158, 4294901760
    %v160 = vsub.f32 %v158, %v159
    %v161 = vand.u32 %v160, 4294901760
    %162 = vmatpush.msra.mxu0 %v161
    %v163 = vand.u32 %v51, 4294901760
    %v164 = vsub.f32 %v51, %v163
    %v165 = vand.u32 %v164, 4294901760
    %v166 = vsub.f32 %v164, %v165
    %v167 = vand.u32 %v166, 4294901760
    %168 = vmatpush.msra.mxu0 %v167
    %v169 = vand.u32 %v50, 4294901760
    %v170 = vsub.f32 %v50, %v169
    %v171 = vand.u32 %v170, 4294901760
    %v172 = vsub.f32 %v170, %v171
    %v173 = vand.u32 %v172, 4294901760
    %174 = vmatpush.msra.mxu0 %v173
    %v175 = vand.u32 %v49, 4294901760
    %v176 = vsub.f32 %v49, %v175
    %v177 = vand.u32 %v176, 4294901760
    %v178 = vsub.f32 %v176, %v177
    %v179 = vand.u32 %v178, 4294901760
    %180 = vmatpush.msra.mxu0 %v179
    %v181 = vand.u32 %v48, 4294901760
    %v182 = vsub.f32 %v48, %v181
    %v183 = vand.u32 %v182, 4294901760
    %v184 = vsub.f32 %v182, %v183
    %v185 = vand.u32 %v184, 4294901760
    %186 = vmatpush.msra.mxu0 %v185
    %v187 = vand.u32 %v47, 4294901760
    %v188 = vsub.f32 %v47, %v187
    %v189 = vand.u32 %v188, 4294901760
    %v190 = vsub.f32 %v188, %v189
    %v191 = vand.u32 %v190, 4294901760
    %192 = vmatpush.msra.mxu0 %v191
    %v193 = vand.u32 %v46, 4294901760
    %v194 = vsub.f32 %v46, %v193
    %v195 = vand.u32 %v194, 4294901760
    %v196 = vsub.f32 %v194, %v195
    %v197 = vand.u32 %v196, 4294901760
    %198 = vmatpush.msra.mxu0 %v197
    %v199 = vand.u32 %v44, 4294901760
    %200 = vmatmul.f32.gmra.mxu0 %v199
    %v201 = vpop.f32.mrf.mxu0
    %v202 = vadd.f32 %v101, %v201
    %203 = vdwg.mxu0
    %v204 = vand.u32 %v61, 4294901760
    %v205 = vsub.f32 %v61, %v204
    %206 = vmatpush.msra.mxu0 %v205
    %v207 = vand.u32 %v60, 4294901760
    %v208 = vsub.f32 %v60, %v207
    %209 = vmatpush.msra.mxu0 %v208
    %v210 = vand.u32 %v59, 4294901760
    %v211 = vsub.f32 %v59, %v210
    %212 = vmatpush.msra.mxu0 %v211
    %v213 = vand.u32 %v58, 4294901760
    %v214 = vsub.f32 %v58, %v213
    %215 = vmatpush.msra.mxu0 %v214
    %v216 = vand.u32 %v57, 4294901760
    %v217 = vsub.f32 %v57, %v216
    %218 = vmatpush.msra.mxu0 %v217
    %v219 = vand.u32 %v56, 4294901760
    %v220 = vsub.f32 %v56, %v219
    %221 = vmatpush.msra.mxu0 %v220
    %v222 = vand.u32 %v55, 4294901760
    %v223 = vsub.f32 %v55, %v222
    %224 = vmatpush.msra.mxu0 %v223
    %v225 = vand.u32 %v54, 4294901760
    %v226 = vsub.f32 %v54, %v225
    %227 = vmatpush.msra.mxu0 %v226
    %v228 = vand.u32 %v53, 4294901760
    %v229 = vsub.f32 %v53, %v228
    %230 = vmatpush.msra.mxu0 %v229
    %v231 = vand.u32 %v52, 4294901760
    %v232 = vsub.f32 %v52, %v231
    %233 = vmatpush.msra.mxu0 %v232
    %v234 = vand.u32 %v51, 4294901760
    %v235 = vsub.f32 %v51, %v234
    %236 = vmatpush.msra.mxu0 %v235
    %v237 = vand.u32 %v50, 4294901760
    %v238 = vsub.f32 %v50, %v237
    %239 = vmatpush.msra.mxu0 %v238
    %v240 = vand.u32 %v49, 4294901760
    %v241 = vsub.f32 %v49, %v240
    %242 = vmatpush.msra.mxu0 %v241
    %v243 = vand.u32 %v48, 4294901760
    %v244 = vsub.f32 %v48, %v243
    %245 = vmatpush.msra.mxu0 %v244
    %v246 = vand.u32 %v47, 4294901760
    %v247 = vsub.f32 %v47, %v246
    %248 = vmatpush.msra.mxu0 %v247
    %v249 = vand.u32 %v46, 4294901760
    %v250 = vsub.f32 %v46, %v249
    %251 = vmatpush.msra.mxu0 %v250
    %v252 = vand.u32 %v44, 4294901760
    %v253 = vsub.f32 %v44, %v252
    %254 = vmatmul.f32.gmra.mxu0 %v253
    %v255 = vpop.f32.mrf.mxu0
    %v256 = vadd.f32 %v202, %v255
    %257 = vdwg.mxu0
    %v258 = vand.u32 %v61, 4294901760
    %259 = vmatpush.msra.mxu0 %v258
    %v260 = vand.u32 %v60, 4294901760
    %261 = vmatpush.msra.mxu0 %v260
    %v262 = vand.u32 %v59, 4294901760
    %263 = vmatpush.msra.mxu0 %v262
    %v264 = vand.u32 %v58, 4294901760
    %265 = vmatpush.msra.mxu0 %v264
    %v266 = vand.u32 %v57, 4294901760
    %267 = vmatpush.msra.mxu0 %v266
    %v268 = vand.u32 %v56, 4294901760
    %269 = vmatpush.msra.mxu0 %v268
    %v270 = vand.u32 %v55, 4294901760
    %271 = vmatpush.msra.mxu0 %v270
    %v272 = vand.u32 %v54, 4294901760
    %273 = vmatpush.msra.mxu0 %v272
    %v274 = vand.u32 %v53, 4294901760
    %275 = vmatpush.msra.mxu0 %v274
    %v276 = vand.u32 %v52, 4294901760
    %277 = vmatpush.msra.mxu0 %v276
    %v278 = vand.u32 %v51, 4294901760
    %279 = vmatpush.msra.mxu0 %v278
    %v280 = vand.u32 %v50, 4294901760
    %281 = vmatpush.msra.mxu0 %v280
    %v282 = vand.u32 %v49, 4294901760
    %283 = vmatpush.msra.mxu0 %v282
    %v284 = vand.u32 %v48, 4294901760
    %285 = vmatpush.msra.mxu0 %v284
    %v286 = vand.u32 %v47, 4294901760
    %287 = vmatpush.msra.mxu0 %v286
    %v288 = vand.u32 %v46, 4294901760
    %289 = vmatpush.msra.mxu0 %v288
    %v290 = vand.u32 %v44, 4294901760
    %v291 = vsub.f32 %v44, %v290
    %v292 = vand.u32 %v291, 4294901760
    %293 = vmatmul.f32.gmra.mxu0 %v292
    %v294 = vpop.f32.mrf.mxu0
    %v295 = vadd.f32 %v256, %v294
    %296 = vdwg.mxu0
    %v297 = vand.u32 %v61, 4294901760
    %v298 = vsub.f32 %v61, %v297
    %v299 = vand.u32 %v298, 4294901760
    %300 = vmatpush.msra.mxu0 %v299
    %v301 = vand.u32 %v60, 4294901760
    %v302 = vsub.f32 %v60, %v301
    %v303 = vand.u32 %v302, 4294901760
    %304 = vmatpush.msra.mxu0 %v303
    %v305 = vand.u32 %v59, 4294901760
    %v306 = vsub.f32 %v59, %v305
    %v307 = vand.u32 %v306, 4294901760
    %308 = vmatpush.msra.mxu0 %v307
    %v309 = vand.u32 %v58, 4294901760
    %v310 = vsub.f32 %v58, %v309
    %v311 = vand.u32 %v310, 4294901760
    %312 = vmatpush.msra.mxu0 %v311
    %v313 = vand.u32 %v57, 4294901760
    %v314 = vsub.f32 %v57, %v313
    %v315 = vand.u32 %v314, 4294901760
    %316 = vmatpush.msra.mxu0 %v315
    %v317 = vand.u32 %v56, 4294901760
    %v318 = vsub.f32 %v56, %v317
    %v319 = vand.u32 %v318, 4294901760
    %320 = vmatpush.msra.mxu0 %v319
    %v321 = vand.u32 %v55, 4294901760
    %v322 = vsub.f32 %v55, %v321
    %v323 = vand.u32 %v322, 4294901760
    %324 = vmatpush.msra.mxu0 %v323
    %v325 = vand.u32 %v54, 4294901760
    %v326 = vsub.f32 %v54, %v325
    %v327 = vand.u32 %v326, 4294901760
    %328 = vmatpush.msra.mxu0 %v327
    %v329 = vand.u32 %v53, 4294901760
    %v330 = vsub.f32 %v53, %v329
    %v331 = vand.u32 %v330, 4294901760
    %332 = vmatpush.msra.mxu0 %v331
    %v333 = vand.u32 %v52, 4294901760
    %v334 = vsub.f32 %v52, %v333
    %v335 = vand.u32 %v334, 4294901760
    %336 = vmatpush.msra.mxu0 %v335
    %v337 = vand.u32 %v51, 4294901760
    %v338 = vsub.f32 %v51, %v337
    %v339 = vand.u32 %v338, 4294901760
    %340 = vmatpush.msra.mxu0 %v339
    %v341 = vand.u32 %v50, 4294901760
    %v342 = vsub.f32 %v50, %v341
    %v343 = vand.u32 %v342, 4294901760
    %344 = vmatpush.msra.mxu0 %v343
    %v345 = vand.u32 %v49, 4294901760
    %v346 = vsub.f32 %v49, %v345
    %v347 = vand.u32 %v346, 4294901760
    %348 = vmatpush.msra.mxu0 %v347
    %v349 = vand.u32 %v48, 4294901760
    %v350 = vsub.f32 %v48, %v349
    %v351 = vand.u32 %v350, 4294901760
    %352 = vmatpush.msra.mxu0 %v351
    %v353 = vand.u32 %v47, 4294901760
    %v354 = vsub.f32 %v47, %v353
    %v355 = vand.u32 %v354, 4294901760
    %356 = vmatpush.msra.mxu0 %v355
    %v357 = vand.u32 %v46, 4294901760
    %v358 = vsub.f32 %v46, %v357
    %v359 = vand.u32 %v358, 4294901760
    %360 = vmatpush.msra.mxu0 %v359
    %v361 = vand.u32 %v44, 4294901760
    %362 = vmatmul.f32.gmra.mxu0 %v361
    %v363 = vpop.f32.mrf.mxu0
    %v364 = vadd.f32 %v295, %v363
    %365 = vdwg.mxu0
    %v366 = vand.u32 %v61, 4294901760
    %367 = vmatpush.msra.mxu0 %v366
    %v368 = vand.u32 %v60, 4294901760
    %369 = vmatpush.msra.mxu0 %v368
    %v370 = vand.u32 %v59, 4294901760
    %371 = vmatpush.msra.mxu0 %v370
    %v372 = vand.u32 %v58, 4294901760
    %373 = vmatpush.msra.mxu0 %v372
    %v374 = vand.u32 %v57, 4294901760
    %375 = vmatpush.msra.mxu0 %v374
    %v376 = vand.u32 %v56, 4294901760
    %377 = vmatpush.msra.mxu0 %v376
    %v378 = vand.u32 %v55, 4294901760
    %379 = vmatpush.msra.mxu0 %v378
    %v380 = vand.u32 %v54, 4294901760
    %381 = vmatpush.msra.mxu0 %v380
    %v382 = vand.u32 %v53, 4294901760
    %383 = vmatpush.msra.mxu0 %v382
    %v384 = vand.u32 %v52, 4294901760
    %385 = vmatpush.msra.mxu0 %v384
    %v386 = vand.u32 %v51, 4294901760
    %387 = vmatpush.msra.mxu0 %v386
    %v388 = vand.u32 %v50, 4294901760
    %389 = vmatpush.msra.mxu0 %v388
    %v390 = vand.u32 %v49, 4294901760
    %391 = vmatpush.msra.mxu0 %v390
    %v392 = vand.u32 %v48, 4294901760
    %393 = vmatpush.msra.mxu0 %v392
    %v394 = vand.u32 %v47, 4294901760
    %395 = vmatpush.msra.mxu0 %v394
    %v396 = vand.u32 %v46, 4294901760
    %397 = vmatpush.msra.mxu0 %v396
    %v398 = vand.u32 %v44, 4294901760
    %399 = vmatmul.f32.gmra.mxu0 %v398
    %v400 = vpop.f32.mrf.mxu0
    %v401 = vadd.f32 %v364, %v400
    %402 = vdwg.mxu0
    %v403 = vadd.f32 %v45, %v401
    %404 = vst [vmem:[#allocation2] sm:$0xff] %v403
    // Predicated region
    $region18: #{tpu_custom_call.1} parent=1 // pred_check
      %p405 = pneg %p28
    $region19: #{tpu_custom_call.1} parent=1 // pred_check_branch
      %407 = sbr.rel (%p405) target = $region21
    $region20: #{tpu_custom_call.1} parent=1 // pred_region
      %v408 = vld [vmem:[#allocation2] sm:$0xff]
      %409 = vst [vmem:[#allocation6] sm:$0xff] %v408
    $region21: #{tpu_custom_call.1} parent=1 // pred_fallthru
      _
    // Predicated region
    $region22: #{tpu_custom_call.1} parent=1 // pred_check
      _
    $region23: #{tpu_custom_call.1} parent=1 // pred_check_branch
      %411 = sbr.rel (0) target = $region25
    $region24: #{tpu_custom_call.1} parent=1 // pred_region
      %413 = vsyncadd [#allocation5], 0
      %s415 = sshll.u32 [#allocation6], 4
      %s416 = int_to_ptr.vmem [resolvable:$true] %s415
      %s417 = sshll.u32 %s2, 4
      %s418 = int_to_ptr.hbm [resolvable:$true] %s417
      %420 = dma.vmem_to_hbm [thread:$0]  %s416, 128, %s418, [#allocation5]
    $region25: #{tpu_custom_call.1} parent=1 // pred_fallthru
      _
    // Predicated region
    $region26: #{tpu_custom_call.1} parent=1 // pred_check
      _
    $region27: #{tpu_custom_call.1} parent=1 // pred_check_branch
      %422 = sbr.rel (0) target = $region29
    $region28: #{tpu_custom_call.1} parent=1 // pred_region
      %424 = dma.done [#allocation5], 128
    $region29: #{tpu_custom_call.1} parent=1 // pred_fallthru
      _
    %425 = vsyncpa [#allocation4], 1
    %426 = vsyncpa [#allocation5], 1

</llo_original>
